<compile_context>
chip_gen: v6e
topology: v6e:2x2x1
jax: 0.10.0
libtpu: 0.0.40
codegen_flags: <defaults>
</compile_context>

<pallas_src>
import functools

import jax
import jax.numpy as jnp
from jax.experimental import pallas as pl
from jax.experimental.pallas import tpu as pltpu


# ---------------------------------------------------------------------------
# Kernels
# ---------------------------------------------------------------------------
def _laplacian_flat_kernel(mask_ref, x_ref, o_ref, *, W, HW):
    """Stencil on a block of row-major flattened images.

    x_ref:    (rows, H*W)  -- each row is one (n, c) image, lane-dense.
    mask_ref: (4,    H*W)  -- bf16 border-validity masks (up/down/left/right);
                              zeros implement the zero padding of F.pad and
                              kill the roll wrap-around.
    Compute is always f32; the store casts back to the I/O dtype.
    """
    x = x_ref[...].astype(jnp.float32)
    m = mask_ref[...].astype(jnp.float32)
    # Single running accumulator keeps vreg pressure low (perf review).
    acc = m[0:1, :] * pltpu.roll(x, shift=W, axis=1)         # up:    x[p-W]
    acc += m[1:2, :] * pltpu.roll(x, shift=HW - W, axis=1)   # down:  x[p+W]
    acc += m[2:3, :] * pltpu.roll(x, shift=1, axis=1)        # left:  x[p-1]
    acc += m[3:4, :] * pltpu.roll(x, shift=HW - 1, axis=1)   # right: x[p+1]
    o_ref[...] = (acc - 4.0 * x).astype(o_ref.dtype)


def _laplacian_image_kernel(mask_ref, x_ref, o_ref, *, H, W):
    """Fallback for very large H*W: block is (rows, H, W); up/down neighbours
    are sublane rolls, left/right are lane rolls.  mask_ref: (4, H, W) bf16."""
    x = x_ref[...].astype(jnp.float32)
    m = mask_ref[...].astype(jnp.float32)
    acc = m[0] * pltpu.roll(x, shift=1, axis=1)        # up:    x[i-1, j]
    acc += m[1] * pltpu.roll(x, shift=H - 1, axis=1)   # down:  x[i+1, j]
    acc += m[2] * pltpu.roll(x, shift=1, axis=2)       # left:  x[i, j-1]
    acc += m[3] * pltpu.roll(x, shift=W - 1, axis=2)   # right: x[i, j+1]
    o_ref[...] = (acc - 4.0 * x).astype(o_ref.dtype)


# ---------------------------------------------------------------------------
# Generation-aware sizing helpers (host-side Python, no compile risk)
# ---------------------------------------------------------------------------
def _tpu_hw():
    """Best-effort (vmem_capacity_bytes, tensorcores_per_chip)."""
    vmem = 64 * 1024 * 1024          # conservative default = v7x per-TC size
    cores = 1
    try:
        info = pltpu.get_tpu_info()
        v = getattr(info, "vmem_capacity_bytes", None)
        if v:
            vmem = int(v)
        for attr in ("tensorcores_per_chip", "num_tensorcores", "num_cores"):
            c = getattr(info, attr, None)
            if c:
                cores = int(c)
                break
    except Exception:
        pass
    try:
        kind = jax.devices()[0].device_kind.lower()
        if any(t in kind for t in ("v7", "v4", "v5p")):
            cores = max(cores, 2)          # megacore / 2-TC chips
        if "v7" in kind:
            vmem = min(vmem, 64 * 1024 * 1024)
    except Exception:
        pass
    return vmem, cores


def _choose_block_rows(nc, hw, isz, vmem_limit, mask_resident, num_cores):
    """Rows of the fused N*C axis per block for the lane-dense path.

    Returns 0 if even the minimal legal (8-row) block does not fit the VMEM
    budget (caller switches to the per-image fallback)."""
    if nc <= 8:
        return nc                              # full extent is always legal
    bytes_per_row_db = 2 * hw * (isz + isz)    # double-buffered in + out
    data_budget = vmem_limit - mask_resident - (2 << 20)
    rows_cap = (data_budget // bytes_per_row_db) // 8 * 8
    if rows_cap < 8:
        return 0
    # Target block ~vmem_limit/8: ~12 MiB input blocks on 96-MiB-limit chips
    # (v5e/v6e), ~6 MiB on v7x -- amortizes the ~0.35 us/step overhead.
    target_in_bytes = max(4 << 20, vmem_limit // 8)
    rows_tgt = max(8, (target_in_bytes // (hw * isz)) // 8 * 8)
    rows = min(rows_cap, rows_tgt, (nc // 8) * 8)
    # On multi-TensorCore chips keep the ("parallel",) grid axis balanced:
    # round the number of blocks up to a multiple of the core count.
    # (On single-TC v5e/v6e we keep the largest legal block -- no forced split.)
    if num_cores > 1 and nc > rows:
        nblocks = pl.cdiv(nc, rows)
        nblocks = pl.cdiv(nblocks, num_cores) * num_cores
        rows_even = max(8, pl.cdiv(pl.cdiv(nc, nblocks), 8) * 8)
        rows = min(rows, rows_even)
    return max(rows, 8)


# ---------------------------------------------------------------------------
# Wrapper
# ---------------------------------------------------------------------------
def physics_layer(x):
    """Pallas equivalent of PhysicsLayer.forward on (N, C, H, W) input.

    Depthwise conv with the fixed filter [[0,1,0],[1,-4,1],[0,1,0]], zero
    padding 1, stride 1 (5-point Laplacian applied per channel).  Supports
    float32 (matches the PyTorch module) and bfloat16 I/O (half HBM bytes;
    in-kernel compute stays float32).
    """
    N, C, H, W = x.shape
    NC, HW = N * C, H * W
    isz = x.dtype.itemsize

    vmem_bytes, num_cores = _tpu_hw()
    # Leave ~25% physical VMEM headroom: ~96 MiB on 128-MiB chips (v5e/v6e),
    # 48 MiB on v7x's 64-MiB-per-TC layout.
    vmem_limit = max(32 * 1024 * 1024, min((vmem_bytes * 3) // 4, 96 * 1024 * 1024))

    mask_resident = 2 * 4 * HW * 2      # double-buffered bf16 (4, HW) masks
    rows = _choose_block_rows(NC, HW, isz, vmem_limit, mask_resident, num_cores)

    if rows > 0:
        # ---- main path: lane-dense flattened (NC, HW) layout ----
        x2 = x.reshape(NC, HW)                      # free, contiguous reshape
        p = jnp.arange(HW, dtype=jnp.int32)
        col = p % W
        masks = jnp.stack(
            [
                p >= W,          # up neighbor exists    (i > 0)
                p < HW - W,      # down neighbor exists  (i < H-1)
                col > 0,         # left neighbor exists  (j > 0)
                col < W - 1,     # right neighbor exists (j < W-1)
            ]
        ).astype(jnp.bfloat16)                      # exact 0/1 values
        grid = (pl.cdiv(NC, rows),)
        out2 = pl.pallas_call(
            functools.partial(_laplacian_flat_kernel, W=W, HW=HW),
            out_shape=jax.ShapeDtypeStruct((NC, HW), x.dtype),
            grid=grid,
            in_specs=[
                pl.BlockSpec((4, HW), lambda i: (0, 0)),      # masks (resident)
                pl.BlockSpec((rows, HW), lambda i: (i, 0)),   # input block
            ],
            out_specs=pl.BlockSpec((rows, HW), lambda i: (i, 0)),
            compiler_params=pltpu.CompilerParams(
                # TODO(synk): if xprof shows "parallel" not sharding across the
                # two v7x TCs, switch this axis to pltpu.CORE_PARALLEL.
                dimension_semantics=("parallel",),
                vmem_limit_bytes=vmem_limit,
            ),
        )(masks, x2)
        return out2.reshape(N, C, H, W)

    # ---- fallback: huge H*W, tile per image as (rows_img, H, W) ----
    per_row_bytes_db = 2 * HW * (isz + isz)
    budget = vmem_limit - 2 * 4 * HW * 2 - (2 << 20)
    rows_img = int(budget // per_row_bytes_db)
    if rows_img < 1:
        # TODO(synk): halo-tiled (H-chunked) Pallas path for images whose
        # single (H, W) plane does not fit VMEM; fall back to the XLA stencil.
        return physics_layer_ref(x)
    rows_img = min(rows_img, NC)

    x3 = x.reshape(NC, H, W)
    row = jnp.arange(H, dtype=jnp.int32)[:, None]
    colv = jnp.arange(W, dtype=jnp.int32)[None, :]
    masks3 = jnp.stack(
        [
            jnp.broadcast_to(row > 0, (H, W)),
            jnp.broadcast_to(row < H - 1, (H, W)),
            jnp.broadcast_to(colv > 0, (H, W)),
            jnp.broadcast_to(colv < W - 1, (H, W)),
        ]
    ).astype(jnp.bfloat16)
    grid = (pl.cdiv(NC, rows_img),)
    out3 = pl.pallas_call(
        functools.partial(_laplacian_image_kernel, H=H, W=W),
        out_shape=jax.ShapeDtypeStruct((NC, H, W), x.dtype),
        grid=grid,
        in_specs=[
            pl.BlockSpec((4, H, W), lambda i: (0, 0, 0)),
            pl.BlockSpec((rows_img, H, W), lambda i: (i, 0, 0)),
        ],
        out_specs=pl.BlockSpec((rows_img, H, W), lambda i: (i, 0, 0)),
        compiler_params=pltpu.CompilerParams(
            dimension_semantics=("parallel",),
            vmem_limit_bytes=vmem_limit,
        ),
    )(masks3, x3)
    return out3.reshape(N, C, H, W)


def physics_layer_ref(x):
    """Pure-JAX reference: zero-pad and sum shifted copies (same stencil)."""
    xp = jnp.pad(x, ((0, 0), (0, 0), (1, 1), (1, 1)))
    return (
        xp[:, :, :-2, 1:-1]    # up neighbor
        + xp[:, :, 2:, 1:-1]   # down neighbor
        + xp[:, :, 1:-1, :-2]  # left neighbor
        + xp[:, :, 1:-1, 2:]   # right neighbor
        - 4.0 * x
    )


if __name__ == "__main__":
    key = jax.random.PRNGKey(0)
    # Small NCHW input consistent with the module (no learnable params; the
    # physics filter is a fixed constant).
    x = jax.random.uniform(key, (2, 4, 16, 16), dtype=jnp.float32)

    # f32 path: must match the PyTorch/f32 reference to tight tolerance.
    out = jax.block_until_ready(physics_layer(x))
    ref = physics_layer_ref(x)
    assert out.shape == x.shape and out.dtype == x.dtype
    assert jnp.allclose(out, ref, atol=1e-5, rtol=1e-5)

    # bf16 I/O path (half the HBM bytes; compute stays f32 inside the kernel).
    xb = x.astype(jnp.bfloat16)
    outb = jax.block_until_ready(physics_layer(xb))
    assert outb.shape == x.shape and outb.dtype == jnp.bfloat16
    assert jnp.allclose(outb.astype(jnp.float32), ref, atol=8e-2)

    print("KERNEL_OK")
</pallas_src>

<mosaic_0001>
module attributes {stable_mosaic.version = 11 : i64} {
  func.func @_laplacian_flat_kernel(%arg0: i32, %arg1: memref<4x256xbf16, #tpu.memory_space<vmem>>, %arg2: memref<8x256xf32, #tpu.memory_space<vmem>>, %arg3: memref<8x256xf32, #tpu.memory_space<vmem>>) attributes {dimension_semantics = [#tpu.dimension_semantics<parallel>], iteration_bounds = array<i64: 1>, scalar_prefetch = 0 : i64, scratch_operands = 0 : i64, tpu.core_type = #tpu.core_type<tc>, window_params = [{pipeline_mode = #tpu.pipeline_mode<synchronous>, transform_indices = @transform_0, window_bounds = array<i64: 4, 256>}, {transform_indices = @transform_1, window_bounds = array<i64: 8, 256>}, {transform_indices = @transform_2, window_bounds = array<i64: 8, 256>}]} {
    %c0 = arith.constant 0 : index
    %c0_0 = arith.constant 0 : index
    %0 = vector.load %arg2[%c0, %c0_0] : memref<8x256xf32, #tpu.memory_space<vmem>>, vector<8x256xf32>
    %c0_1 = arith.constant 0 : index
    %c0_2 = arith.constant 0 : index
    %1 = vector.load %arg1[%c0_1, %c0_2] : memref<4x256xbf16, #tpu.memory_space<vmem>>, vector<4x256xbf16>
    %2 = arith.extf %1 : vector<4x256xbf16> to vector<4x256xf32>
    %3 = vector.extract_strided_slice %2 {offsets = [0, 0], sizes = [1, 256], strides = [1, 1]} : vector<4x256xf32> to vector<1x256xf32>
    %c16_i32 = arith.constant 16 : i32
    %4 = tpu.dynamic_rotate %0 by %c16_i32 dim 1 : vector<8x256xf32>, i32 -> vector<8x256xf32>
    %5 = vector.broadcast %3 : vector<1x256xf32> to vector<8x256xf32>
    %6 = arith.mulf %5, %4 : vector<8x256xf32>
    %7 = vector.extract_strided_slice %2 {offsets = [1, 0], sizes = [1, 256], strides = [1, 1]} : vector<4x256xf32> to vector<1x256xf32>
    %c240_i32 = arith.constant 240 : i32
    %8 = tpu.dynamic_rotate %0 by %c240_i32 dim 1 : vector<8x256xf32>, i32 -> vector<8x256xf32>
    %9 = vector.broadcast %7 : vector<1x256xf32> to vector<8x256xf32>
    %10 = arith.mulf %9, %8 : vector<8x256xf32>
    %11 = arith.addf %6, %10 : vector<8x256xf32>
    %12 = vector.extract_strided_slice %2 {offsets = [2, 0], sizes = [1, 256], strides = [1, 1]} : vector<4x256xf32> to vector<1x256xf32>
    %c1_i32 = arith.constant 1 : i32
    %13 = tpu.dynamic_rotate %0 by %c1_i32 dim 1 : vector<8x256xf32>, i32 -> vector<8x256xf32>
    %14 = vector.broadcast %12 : vector<1x256xf32> to vector<8x256xf32>
    %15 = arith.mulf %14, %13 : vector<8x256xf32>
    %16 = arith.addf %11, %15 : vector<8x256xf32>
    %17 = vector.extract_strided_slice %2 {offsets = [3, 0], sizes = [1, 256], strides = [1, 1]} : vector<4x256xf32> to vector<1x256xf32>
    %c255_i32 = arith.constant 255 : i32
    %18 = tpu.dynamic_rotate %0 by %c255_i32 dim 1 : vector<8x256xf32>, i32 -> vector<8x256xf32>
    %19 = vector.broadcast %17 : vector<1x256xf32> to vector<8x256xf32>
    %20 = arith.mulf %19, %18 : vector<8x256xf32>
    %21 = arith.addf %16, %20 : vector<8x256xf32>
    %cst = arith.constant 4.000000e+00 : f32
    %22 = vector.broadcast %cst : f32 to vector<8x256xf32>
    %23 = arith.mulf %22, %0 : vector<8x256xf32>
    %24 = arith.subf %21, %23 : vector<8x256xf32>
    %c0_3 = arith.constant 0 : index
    %c0_4 = arith.constant 0 : index
    %25 = vector.load %arg3[%c0_3, %c0_4] : memref<8x256xf32, #tpu.memory_space<vmem>>, vector<8x256xf32>
    tpu.vector_store %arg3[%c0_3, %c0_4], %24 {strides = array<i32>} : memref<8x256xf32, #tpu.memory_space<vmem>>, vector<8x256xf32>,
    return
  }
  func.func @transform_0(%arg0: i32) -> (i32, i32) {
    %c0_i32 = arith.constant 0 : i32
    %c0_i32_0 = arith.constant 0 : i32
    %c0_i32_1 = arith.constant 0 : i32
    return %c0_i32, %c0_i32_0 : i32, i32
  }
  func.func @transform_1(%arg0: i32) -> (i32, i32) {
    %c0_i32 = arith.constant 0 : i32
    %c0_i32_0 = arith.constant 0 : i32
    return %arg0, %c0_i32 : i32, i32
  }
  func.func @transform_2(%arg0: i32) -> (i32, i32) {
    %c0_i32 = arith.constant 0 : i32
    %c0_i32_0 = arith.constant 0 : i32
    return %arg0, %c0_i32 : i32, i32
  }
}

</mosaic_0001>

<llo_original>
// kernel: tpu_custom_call.1
$region0: #{tpu_custom_call.1}
  #allocation0 [shape = 'u32[]', space=smem, size = 0x4, offset = 0x4, fixed_abs, tag = 'smem constant byte address 0x4 - core index']
  #allocation1 [shape = 'u32[144,128]{1,0:T(1,128)}', space=vmem, size = 0x12000, scoped, tag = 'internal scratch']
  %s0 = inlined_call_operand.hbm [shape: bf16[4,256], index: 0, kind: input, shape index: {}]
  %s1 = inlined_call_operand.hbm [shape: f32[8,256], index: 1, kind: input, shape index: {}]
  %s2 = inlined_call_operand.hbm [shape: f32[8,256], index: 2, kind: output, shape index: {}]
  %s3 = sld [smem:[#allocation0]]
  $region26: #{tpu_custom_call.1} parent=0
    _
  %s5 = ssub.s32 1, %s3
  %s6 = scalar_select 0, %s5, %s3
  $region1: #{tpu_custom_call.1} parent=0
    #allocation2 [shape = 'u8[2048]{0}', space=vmem, size = 0x800, scoped, tag = 'input window, operand 0, single buffered']
    #allocation3 [shape = 's32[1]{0}', space=sflag, size = 0x4, scoped, tag = 'scoped memory for tpu_custom_call.1']
    #allocation4 [shape = 's32[1]{0}', space=sflag, size = 0x4, scoped, tag = 'scoped memory for tpu_custom_call.1']
    #allocation5 [shape = 'u8[8192]{0}', space=vmem, size = 0x2000, scoped, tag = 'input window, operand 1, single buffered']
    #allocation6 [shape = 's32[1]{0}', space=sflag, size = 0x4, scoped, tag = 'scoped memory for tpu_custom_call.1']
    #allocation7 [shape = 'u8[8192]{0}', space=vmem, size = 0x2000, scoped, tag = 'output window, operand 0, single buffered']
    %7 = vsyncpa [#allocation3], 0
    %8 = vsyncpa [#allocation6], 0
    %9 = vsyncpa [#allocation4], 0
    // Predicated region
    $region2: #{tpu_custom_call.1} parent=1 // pred_check
      _
    $region3: #{tpu_custom_call.1} parent=1 // pred_check_branch
      %11 = sbr.rel (0) target = $region5
    $region4: #{tpu_custom_call.1} parent=1 // pred_region
      %s13 = ssub.s32 64, 64
      %14 = vsyncadd [#allocation3], %s13
      %s16 = sshll.u32 [#allocation2], 4
      %s17 = int_to_ptr.vmem [resolvable:$true] %s16
      %19 = dma.hbm_to_vmem [thread:$0]  %s0, 64, %s17, [#allocation3]
    $region5: #{tpu_custom_call.1} parent=1 // pred_fallthru
      _
    // Predicated region
    $region6: #{tpu_custom_call.1} parent=1 // pred_check
      _
    $region7: #{tpu_custom_call.1} parent=1 // pred_check_branch
      %21 = sbr.rel (0) target = $region9
    $region8: #{tpu_custom_call.1} parent=1 // pred_region
      %s23 = ssub.s32 256, 256
      %24 = vsyncadd [#allocation6], %s23
      %s26 = sshll.u32 [#allocation5], 4
      %s27 = int_to_ptr.vmem [resolvable:$true] %s26
      %29 = dma.hbm_to_vmem [thread:$0]  %s1, 256, %s27, [#allocation6]
    $region9: #{tpu_custom_call.1} parent=1 // pred_fallthru
      _
    // Predicated region
    $region10: #{tpu_custom_call.1} parent=1 // pred_check
      _
    $region11: #{tpu_custom_call.1} parent=1 // pred_check_branch
      %31 = sbr.rel (0) target = $region13
    $region12: #{tpu_custom_call.1} parent=1 // pred_region
      %32 = dma.done [#allocation3], 64
    $region13: #{tpu_custom_call.1} parent=1 // pred_fallthru
      _
    // Predicated region
    $region14: #{tpu_custom_call.1} parent=1 // pred_check
      _
    $region15: #{tpu_custom_call.1} parent=1 // pred_check_branch
      %34 = sbr.rel (0) target = $region17
    $region16: #{tpu_custom_call.1} parent=1 // pred_region
      %35 = dma.done [#allocation6], 256
    $region17: #{tpu_custom_call.1} parent=1 // pred_fallthru
      _
    %v36 = vld [vmem:[#allocation5] sm:$0xff]
    %v37 = vld [vmem:[#allocation5 + $0x8] sm:$0xff]
    %v38 = vld [vmem:[#allocation2] sm:$0xf]
    %v39 = vunpack.c.l.bf16 %v38
    %40 = vrot.lane.b32.xlu0 %v36, 16
    %v41 = vpop.permute.xlu0 %40
    %42 = vrot.lane.b32.xlu0 %v37, 16
    %v43 = vpop.permute.xlu0 %42
    %v44 = vlaneseq
    %v45 = vand.u32 %v44, 127
    %vm46 = vcmp.lt.s32.totalorder %v45, 16
    %v47 = vsel %vm46, %v41, %v43
    %v48 = vsel %vm46, %v43, %v41
    %v50 = vlaneseq
    %v51 = vshrl.u32 %v50, 7
    %v52 = vsub.s32 0, %v51
    %v53 = vrot.slane %v39, %v52
    %v54 = vlaneseq
    %v55 = vshrl.u32 %v54, 7
    %v56 = vsub.s32 4, %v55
    %v57 = vrot.slane %v39, %v56
    %v60 = vlaneseq
    %v61 = vshrl.u32 %v60, 7
    %v62 = vsub.s32 0, %v61
    %v63 = vrot.slane %v53, %v62
    %v64 = vlaneseq
    %v65 = vshrl.u32 %v64, 7
    %v66 = vsub.s32 0, %v65
    %v67 = vrot.slane %v57, %v66
    %v68 = vmul.f32 %v63, %v48
    %v69 = vmul.f32 %v67, %v47
    %70 = vrot.lane.b32.xlu0 %v36, 112
    %v71 = vpop.permute.xlu0 %70
    %72 = vrot.lane.b32.xlu0 %v37, 112
    %v73 = vpop.permute.xlu0 %72
    %vm74 = vcmp.lt.s32.totalorder %v45, 112
    %v75 = vsel %vm74, %v71, %v73
    %v76 = vsel %vm74, %v73, %v71
    %v77 = vlaneseq
    %v78 = vshrl.u32 %v77, 7
    %v79 = vsub.s32 1, %v78
    %v80 = vrot.slane %v39, %v79
    %v81 = vlaneseq
    %v82 = vshrl.u32 %v81, 7
    %v83 = vsub.s32 5, %v82
    %v84 = vrot.slane %v39, %v83
    %v87 = vlaneseq
    %v88 = vshrl.u32 %v87, 7
    %v89 = vsub.s32 1, %v88
    %v90 = vrot.slane %v80, %v89
    %v91 = vlaneseq
    %v92 = vshrl.u32 %v91, 7
    %v93 = vsub.s32 1, %v92
    %v94 = vrot.slane %v84, %v93
    %v95 = vmul.f32 %v90, %v75
    %v96 = vmul.f32 %v94, %v76
    %v97 = vadd.f32 %v68, %v95
    %v98 = vadd.f32 %v69, %v96
    %99 = vrot.lane.b32.xlu0 %v36, 1
    %v100 = vpop.permute.xlu0 %99
    %101 = vrot.lane.b32.xlu0 %v37, 1
    %v102 = vpop.permute.xlu0 %101
    %vm103 = vcmp.lt.s32.totalorder %v45, 1
    %v104 = vsel %vm103, %v100, %v102
    %v105 = vsel %vm103, %v102, %v100
    %v106 = vlaneseq
    %v107 = vshrl.u32 %v106, 7
    %v108 = vsub.s32 2, %v107
    %v109 = vrot.slane %v39, %v108
    %v110 = vlaneseq
    %v111 = vshrl.u32 %v110, 7
    %v112 = vsub.s32 6, %v111
    %v113 = vrot.slane %v39, %v112
    %v116 = vlaneseq
    %v117 = vshrl.u32 %v116, 7
    %v118 = vsub.s32 2, %v117
    %v119 = vrot.slane %v109, %v118
    %v120 = vlaneseq
    %v121 = vshrl.u32 %v120, 7
    %v122 = vsub.s32 2, %v121
    %v123 = vrot.slane %v113, %v122
    %v124 = vmul.f32 %v119, %v105
    %v125 = vmul.f32 %v123, %v104
    %v126 = vadd.f32 %v97, %v124
    %v127 = vadd.f32 %v98, %v125
    %128 = vrot.lane.b32.xlu0 %v36, 127
    %v129 = vpop.permute.xlu0 %128
    %130 = vrot.lane.b32.xlu0 %v37, 127
    %v131 = vpop.permute.xlu0 %130
    %vm132 = vcmp.lt.s32.totalorder %v45, 127
    %v133 = vsel %vm132, %v129, %v131
    %v134 = vsel %vm132, %v131, %v129
    %v135 = vlaneseq
    %v136 = vshrl.u32 %v135, 7
    %v137 = vsub.s32 3, %v136
    %v138 = vrot.slane %v39, %v137
    %v139 = vlaneseq
    %v140 = vshrl.u32 %v139, 7
    %v141 = vsub.s32 7, %v140
    %v142 = vrot.slane %v39, %v141
    %v145 = vlaneseq
    %v146 = vshrl.u32 %v145, 7
    %v147 = vsub.s32 3, %v146
    %v148 = vrot.slane %v138, %v147
    %v149 = vlaneseq
    %v150 = vshrl.u32 %v149, 7
    %v151 = vsub.s32 3, %v150
    %v152 = vrot.slane %v142, %v151
    %v153 = vmul.f32 %v148, %v133
    %v154 = vmul.f32 %v152, %v134
    %v155 = vadd.f32 %v126, %v153
    %v156 = vadd.f32 %v127, %v154
    %v157 = vmul.f32 %v36, 4.0
    %v158 = vmul.f32 %v37, 4.0
    %v159 = vsub.f32 %v155, %v157
    %v160 = vsub.f32 %v156, %v158
    %161 = vst [vmem:[#allocation7] sm:$0xff] %v159
    %162 = vst [vmem:[#allocation7 + $0x8] sm:$0xff] %v160
    // Predicated region
    $region18: #{tpu_custom_call.1} parent=1 // pred_check
      _
    $region19: #{tpu_custom_call.1} parent=1 // pred_check_branch
      %164 = sbr.rel (0) target = $region21
    $region20: #{tpu_custom_call.1} parent=1 // pred_region
      %s166 = ssub.s32 256, 256
      %167 = vsyncadd [#allocation4], %s166
      %s169 = sshll.u32 [#allocation7], 4
      %s170 = int_to_ptr.vmem [resolvable:$true] %s169
      %172 = dma.vmem_to_hbm [thread:$0]  %s170, 256, %s2, [#allocation4]
    $region21: #{tpu_custom_call.1} parent=1 // pred_fallthru
      _
    // Predicated region
    $region22: #{tpu_custom_call.1} parent=1 // pred_check
      _
    $region23: #{tpu_custom_call.1} parent=1 // pred_check_branch
      %174 = sbr.rel (0) target = $region25
    $region24: #{tpu_custom_call.1} parent=1 // pred_region
      %175 = dma.done [#allocation4], 256
    $region25: #{tpu_custom_call.1} parent=1 // pred_fallthru
      _
    %176 = vsyncpa [#allocation3], 1
    %177 = vsyncpa [#allocation6], 1
    %178 = vsyncpa [#allocation4], 1

</llo_original>
